<compile_context>
chip_gen: v7x
topology: tpu7x:2x2x1
jax: 0.10.0
libtpu: 0.0.40
codegen_flags: <defaults>
</compile_context>

<pallas_src>
import functools

import jax
import jax.numpy as jnp
from jax import lax
from jax.experimental import pallas as pl
from jax.experimental.pallas import tpu as pltpu


_MASK_VALUE = -1e30  # large finite negative: avoids -inf/-inf NaNs in online softmax
_VMEM_LIMIT = 48 * 1024 * 1024  # explicit scoped-VMEM ceiling: above v5e/v6e defaults,
                                # comfortably under v7x's 64 MiB physical VMEM.


def _pick_tile(n, preferred):
    """Largest preferred tile (multiples of 8) that evenly divides n; falls
    back to the full extent (always a legal BlockSpec size)."""
    for t in preferred:
        if n % t == 0:
            return t
    return n


# ---------------------------------------------------------------------------
# Kernel 1: fused QKV projection  (1, ts, D) @ (D, 3*Hp) -> three (1, ts, Hp)
# ---------------------------------------------------------------------------
def _qkv_proj_kernel(x_ref, w_ref, q_ref, k_ref, v_ref, *, hp):
    x = x_ref[0]                                                     # (ts, D)
    qkv = jnp.dot(x, w_ref[...], preferred_element_type=jnp.float32)  # (ts, 3*Hp)
    # Lane-aligned (multiples of 128) static slices into the three outputs.
    q_ref[0] = qkv[:, :hp].astype(q_ref.dtype)
    k_ref[0] = qkv[:, hp:2 * hp].astype(k_ref.dtype)
    v_ref[0] = qkv[:, 2 * hp:].astype(v_ref.dtype)


# ---------------------------------------------------------------------------
# Kernel 2: causal flash attention with online softmax
# ---------------------------------------------------------------------------
def _flash_attention_kernel(q_ref, k_ref, v_ref, o_ref,
                            m_ref, l_ref, acc_ref, *, tq, tk):
    # q_ref : (1, tq, Hp)  bf16, already scaled by 1/sqrt(head_dim) via W_q
    # k_ref : (1, tk, Hp)  bf16 (head dim zero-padded -> contraction exact)
    # v_ref : (1, tk, Hp)  bf16
    # o_ref : (1, tq, Hp)  output dtype
    # m_ref / l_ref : (tq, Hp) f32, lane-replicated running max / denom
    # acc_ref       : (tq, Hp) f32 running accumulator
    qi = pl.program_id(1)
    ki = pl.program_id(2)
    nk = pl.num_programs(2)

    q_start = qi * tq
    k_start = ki * tk

    fully_masked = k_start > q_start + (tq - 1)   # tile strictly above the diagonal
    needs_mask = k_start + (tk - 1) > q_start     # tile crosses the diagonal

    @pl.when(ki == 0)
    def _init():
        m_ref[...] = jnp.full_like(m_ref, _MASK_VALUE)
        l_ref[...] = jnp.zeros_like(l_ref)
        acc_ref[...] = jnp.zeros_like(acc_ref)

    def _step(apply_mask):
        q = q_ref[0]                                       # (tq, Hp)
        k = k_ref[0]                                       # (tk, Hp)
        # Contract on the (padded) head axis of both operands; no explicit k.T.
        s = lax.dot_general(q, k, (((1,), (1,)), ((), ())),
                            preferred_element_type=jnp.float32)   # (tq, tk) f32
        if apply_mask:
            rows = q_start + lax.broadcasted_iota(jnp.int32, (tq, tk), 0)
            cols = k_start + lax.broadcasted_iota(jnp.int32, (tq, tk), 1)
            s = jnp.where(cols <= rows, s, _MASK_VALUE)

        m_prev = m_ref[...]                                # (tq, Hp) replicated
        s_max = jnp.max(s, axis=-1, keepdims=True)         # (tq, 1)
        m_new = jnp.maximum(m_prev, s_max)                 # (tq, Hp) replicated
        alpha = jnp.exp(m_prev - m_new)                    # (tq, Hp) replicated
        p = jnp.exp(s - m_new[:, :1])                      # (tq, tk) f32
        l_ref[...] = alpha * l_ref[...] + jnp.sum(p, axis=-1, keepdims=True)
        acc_ref[...] = alpha * acc_ref[...] + jnp.dot(
            p.astype(v_ref.dtype), v_ref[0], preferred_element_type=jnp.float32)
        m_ref[...] = m_new

    @pl.when((~fully_masked) & needs_mask)       # diagonal-crossing tile: masked
    def _diag():
        _step(apply_mask=True)

    @pl.when((~fully_masked) & (~needs_mask))    # strictly-lower tile: no mask
    def _lower():
        _step(apply_mask=False)

    # Strictly-upper (fully masked) tiles contribute nothing: compute skipped,
    # and the clamped K/V index_maps mean no DMA is issued for them either.

    @pl.when(ki == nk - 1)
    def _finalize():
        inv = pl.reciprocal(l_ref[...], approx=True)       # EUP, off the VPU path
        o_ref[0] = (acc_ref[...] * inv).astype(o_ref.dtype)


# ---------------------------------------------------------------------------
# Wrapper
# ---------------------------------------------------------------------------
def self_attention(x, wq, wk, wv, *, matmul_dtype=jnp.bfloat16):
    """x: (B, S, D); wq/wk/wv: (D, H) (already transposed vs. nn.Linear.weight)."""
    B, S, D = x.shape
    H = wq.shape[1]
    Hp = ((H + 127) // 128) * 128            # lane-dense padded head dim

    # Fold 1/sqrt(head_dim) into W_q; zero-pad every head to Hp lanes (exact
    # for the contracted axis); pack into one (D, 3*Hp) weight.
    pad = ((0, 0), (0, Hp - H))
    w_packed = jnp.concatenate([
        jnp.pad(wq * (1.0 / (H ** 0.5)), pad),
        jnp.pad(wk, pad),
        jnp.pad(wv, pad),
    ], axis=1).astype(matmul_dtype)          # (D, 3*Hp)

    xm = x.astype(matmul_dtype)

    # --- fused QKV projection -> three separate (B, S, Hp) tensors ---------
    ts = _pick_tile(S, (1024, 512, 256, 128, 64, 32, 16, 8))
    proj_cost = pl.CostEstimate(
        flops=2 * B * S * D * 3 * Hp,
        transcendentals=0,
        bytes_accessed=2 * (B * S * D + D * 3 * Hp + 3 * B * S * Hp),
    )
    # TODO(synk): if D grows to many K, add a reduction grid axis over D with
    #             an f32 VMEM accumulator instead of a resident (D, 3*Hp) block.
    q, k, v = pl.pallas_call(
        functools.partial(_qkv_proj_kernel, hp=Hp),
        out_shape=(
            jax.ShapeDtypeStruct((B, S, Hp), matmul_dtype),
            jax.ShapeDtypeStruct((B, S, Hp), matmul_dtype),
            jax.ShapeDtypeStruct((B, S, Hp), matmul_dtype),
        ),
        grid_spec=pltpu.PrefetchScalarGridSpec(
            num_scalar_prefetch=0,
            grid=(B, S // ts),
            in_specs=[
                pl.BlockSpec((1, ts, D), lambda b, si: (b, si, 0)),
                pl.BlockSpec((D, 3 * Hp), lambda b, si: (0, 0)),
            ],
            out_specs=[
                pl.BlockSpec((1, ts, Hp), lambda b, si: (b, si, 0)),
                pl.BlockSpec((1, ts, Hp), lambda b, si: (b, si, 0)),
                pl.BlockSpec((1, ts, Hp), lambda b, si: (b, si, 0)),
            ],
        ),
        compiler_params=pltpu.CompilerParams(
            dimension_semantics=("parallel", "parallel"),
            vmem_limit_bytes=_VMEM_LIMIT),
        cost_estimate=proj_cost,
    )(xm, w_packed)

    # --- causal flash attention --------------------------------------------
    tq = _pick_tile(S, (256, 128, 64, 32, 16, 8))
    tk = _pick_tile(S, (512, 256, 128, 64, 32, 16, 8))
    nq, nk = S // tq, S // tk

    def q_map(b, qi, ki):
        return (b, qi, 0)

    def kv_map(b, qi, ki):
        # Clamp to the last kv tile this q block actually needs: fully-masked
        # (strictly-upper) kv steps keep the same block index => no DMA issued.
        last_needed = ((qi + 1) * tq - 1) // tk
        return (b, jnp.minimum(ki, last_needed), 0)

    attn_cost = pl.CostEstimate(
        flops=4 * B * S * S * Hp,            # QK^T + PV (causal halving ignored)
        transcendentals=B * S * S,           # softmax exps
        bytes_accessed=2 * 4 * B * S * Hp,   # Q + K + V + O, bf16-ish
    )

    out_padded = pl.pallas_call(
        functools.partial(_flash_attention_kernel, tq=tq, tk=tk),
        out_shape=jax.ShapeDtypeStruct((B, S, Hp), x.dtype),
        grid_spec=pltpu.PrefetchScalarGridSpec(
            num_scalar_prefetch=0,
            grid=(B, nq, nk),
            in_specs=[
                pl.BlockSpec((1, tq, Hp), q_map),    # Q (padded head dim)
                pl.BlockSpec((1, tk, Hp), kv_map),   # K (clamped causal DMA)
                pl.BlockSpec((1, tk, Hp), kv_map),   # V (clamped causal DMA)
            ],
            out_specs=pl.BlockSpec((1, tq, Hp), q_map),
            scratch_shapes=[
                pltpu.VMEM((tq, Hp), jnp.float32),   # running max (lane-replicated)
                pltpu.VMEM((tq, Hp), jnp.float32),   # running denom (lane-replicated)
                pltpu.VMEM((tq, Hp), jnp.float32),   # running accumulator
            ],
        ),
        compiler_params=pltpu.CompilerParams(
            dimension_semantics=("parallel", "parallel", "arbitrary"),
            vmem_limit_bytes=_VMEM_LIMIT),
        cost_estimate=attn_cost,
    )(q, k, v)

    return out_padded[:, :, :H]


def self_attention_ref(x, wq, wk, wv):
    """Pure-JAX f32 reference mirroring the PyTorch forward (eval mode)."""
    H = wq.shape[1]
    q = x @ wq
    k = x @ wk
    v = x @ wv
    scores = jnp.einsum("bqh,bkh->bqk", q, k) / (H ** 0.5)
    S = x.shape[1]
    tril = jnp.tril(jnp.ones((S, S), dtype=bool))
    scores = jnp.where(tril, scores, -jnp.inf)
    attn = jax.nn.softmax(scores, axis=-1)
    return jnp.einsum("bqk,bkh->bqh", attn, v)


if __name__ == "__main__":
    batch, seq_length, model_dim, head_dim = 2, 8, 32, 16
    dropout_probability = 0.1  # nn.Dropout is identity in eval mode

    key = jax.random.PRNGKey(0)
    kx, kq, kk, kv = jax.random.split(key, 4)

    x = jax.random.normal(kx, (batch, seq_length, model_dim), dtype=jnp.float32)
    # nn.Linear(model_dim, head_dim).weight is (head_dim, model_dim); we store
    # the transpose (model_dim, head_dim) so the kernel computes x @ W.
    scale = 1.0 / (model_dim ** 0.5)
    wq = jax.random.uniform(kq, (model_dim, head_dim), jnp.float32, -scale, scale)
    wk = jax.random.uniform(kk, (model_dim, head_dim), jnp.float32, -scale, scale)
    wv = jax.random.uniform(kv, (model_dim, head_dim), jnp.float32, -scale, scale)

    out = jax.block_until_ready(self_attention(x, wq, wk, wv))
    ref = self_attention_ref(x, wq, wk, wv)

    assert out.shape == (batch, seq_length, head_dim)
    # bf16 MXU operands (f32 accumulate, f32 softmax) -> relaxed tolerance vs f32 ref.
    assert jnp.allclose(out, ref, atol=2.5e-2, rtol=2.5e-2), "mismatch vs reference"
    print("KERNEL_OK")
</pallas_src>

<mosaic_0001>
module attributes {stable_mosaic.version = 11 : i64} {
  func.func @_qkv_proj_kernel(%arg0: i32, %arg1: i32, %arg2: memref<1x8x32xbf16, #tpu.memory_space<vmem>>, %arg3: memref<32x384xbf16, #tpu.memory_space<vmem>>, %arg4: memref<1x8x128xbf16, #tpu.memory_space<vmem>>, %arg5: memref<1x8x128xbf16, #tpu.memory_space<vmem>>, %arg6: memref<1x8x128xbf16, #tpu.memory_space<vmem>>) attributes {dimension_semantics = [#tpu.dimension_semantics<parallel>, #tpu.dimension_semantics<parallel>], iteration_bounds = array<i64: 2, 1>, scalar_prefetch = 0 : i64, scratch_operands = 0 : i64, tpu.core_type = #tpu.core_type<tc>, window_params = [{transform_indices = @transform_0, window_bounds = array<i64: 1, 8, 32>}, {pipeline_mode = #tpu.pipeline_mode<synchronous>, transform_indices = @transform_1, window_bounds = array<i64: 32, 384>}, {transform_indices = @transform_2, window_bounds = array<i64: 1, 8, 128>}, {transform_indices = @transform_3, window_bounds = array<i64: 1, 8, 128>}, {transform_indices = @transform_4, window_bounds = array<i64: 1, 8, 128>}]} {
    %c0 = arith.constant 0 : index
    %c0_0 = arith.constant 0 : index
    %c0_1 = arith.constant 0 : index
    %0 = vector.load %arg2[%c0, %c0_0, %c0_1] : memref<1x8x32xbf16, #tpu.memory_space<vmem>>, vector<1x8x32xbf16>
    %1 = vector.shape_cast %0 : vector<1x8x32xbf16> to vector<8x32xbf16>
    %c0_2 = arith.constant 0 : index
    %c0_3 = arith.constant 0 : index
    %2 = vector.load %arg3[%c0_2, %c0_3] : memref<32x384xbf16, #tpu.memory_space<vmem>>, vector<32x384xbf16>
    %cst = arith.constant dense<0.000000e+00> : vector<8x384xf32>
    %3 = tpu.matmul %1, %2, %cst {dimension_numbers = #tpu.dot_dimension_numbers<[1], [0], [0], [1], [0, 0, 1, 1], [], []>} : vector<8x32xbf16>, vector<32x384xbf16>, vector<8x384xf32> -> vector<8x384xf32>
    %4 = vector.extract_strided_slice %3 {offsets = [0, 0], sizes = [8, 128], strides = [1, 1]} : vector<8x384xf32> to vector<8x128xf32>
    %5 = arith.truncf %4 : vector<8x128xf32> to vector<8x128xbf16>
    %c0_4 = arith.constant 0 : index
    %c0_5 = arith.constant 0 : index
    %c0_6 = arith.constant 0 : index
    %6 = vector.load %arg4[%c0_4, %c0_5, %c0_6] : memref<1x8x128xbf16, #tpu.memory_space<vmem>>, vector<1x8x128xbf16>
    %7 = vector.shape_cast %6 : vector<1x8x128xbf16> to vector<8x128xbf16>
    %8 = vector.shape_cast %5 : vector<8x128xbf16> to vector<1x8x128xbf16>
    tpu.vector_store %arg4[%c0_4, %c0_5, %c0_6], %8 {strides = array<i32>} : memref<1x8x128xbf16, #tpu.memory_space<vmem>>, vector<1x8x128xbf16>,
    %9 = vector.extract_strided_slice %3 {offsets = [0, 128], sizes = [8, 128], strides = [1, 1]} : vector<8x384xf32> to vector<8x128xf32>
    %10 = arith.truncf %9 : vector<8x128xf32> to vector<8x128xbf16>
    %c0_7 = arith.constant 0 : index
    %c0_8 = arith.constant 0 : index
    %c0_9 = arith.constant 0 : index
    %11 = vector.load %arg5[%c0_7, %c0_8, %c0_9] : memref<1x8x128xbf16, #tpu.memory_space<vmem>>, vector<1x8x128xbf16>
    %12 = vector.shape_cast %11 : vector<1x8x128xbf16> to vector<8x128xbf16>
    %13 = vector.shape_cast %10 : vector<8x128xbf16> to vector<1x8x128xbf16>
    tpu.vector_store %arg5[%c0_7, %c0_8, %c0_9], %13 {strides = array<i32>} : memref<1x8x128xbf16, #tpu.memory_space<vmem>>, vector<1x8x128xbf16>,
    %14 = vector.extract_strided_slice %3 {offsets = [0, 256], sizes = [8, 128], strides = [1, 1]} : vector<8x384xf32> to vector<8x128xf32>
    %15 = arith.truncf %14 : vector<8x128xf32> to vector<8x128xbf16>
    %c0_10 = arith.constant 0 : index
    %c0_11 = arith.constant 0 : index
    %c0_12 = arith.constant 0 : index
    %16 = vector.load %arg6[%c0_10, %c0_11, %c0_12] : memref<1x8x128xbf16, #tpu.memory_space<vmem>>, vector<1x8x128xbf16>
    %17 = vector.shape_cast %16 : vector<1x8x128xbf16> to vector<8x128xbf16>
    %18 = vector.shape_cast %15 : vector<8x128xbf16> to vector<1x8x128xbf16>
    tpu.vector_store %arg6[%c0_10, %c0_11, %c0_12], %18 {strides = array<i32>} : memref<1x8x128xbf16, #tpu.memory_space<vmem>>, vector<1x8x128xbf16>,
    return
  }
  func.func @transform_0(%arg0: i32, %arg1: i32) -> (i32, i32, i32) {
    %c0_i32 = arith.constant 0 : i32
    %c0_i32_0 = arith.constant 0 : i32
    return %arg0, %arg1, %c0_i32 : i32, i32, i32
  }
  func.func @transform_1(%arg0: i32, %arg1: i32) -> (i32, i32) {
    %c0_i32 = arith.constant 0 : i32
    %c0_i32_0 = arith.constant 0 : i32
    %c0_i32_1 = arith.constant 0 : i32
    return %c0_i32, %c0_i32_0 : i32, i32
  }
  func.func @transform_2(%arg0: i32, %arg1: i32) -> (i32, i32, i32) {
    %c0_i32 = arith.constant 0 : i32
    %c0_i32_0 = arith.constant 0 : i32
    return %arg0, %arg1, %c0_i32 : i32, i32, i32
  }
  func.func @transform_3(%arg0: i32, %arg1: i32) -> (i32, i32, i32) {
    %c0_i32 = arith.constant 0 : i32
    %c0_i32_0 = arith.constant 0 : i32
    return %arg0, %arg1, %c0_i32 : i32, i32, i32
  }
  func.func @transform_4(%arg0: i32, %arg1: i32) -> (i32, i32, i32) {
    %c0_i32 = arith.constant 0 : i32
    %c0_i32_0 = arith.constant 0 : i32
    return %arg0, %arg1, %c0_i32 : i32, i32, i32
  }
}

</mosaic_0001>

<llo_original>
// kernel: tpu_custom_call.1
$region0: #{tpu_custom_call.1}
  #allocation0 [shape = 'u32[]', space=smem, size = 0x4, offset = 0x4, fixed_abs, tag = 'smem constant byte address 0x4 - core index']
  #allocation1 [shape = 'u32[144,128]{1,0:T(1,128)}', space=vmem, size = 0x12000, scoped, tag = 'internal scratch']
  %s0 = inlined_call_operand.hbm [shape: bf16[2,8,32], index: 0, kind: input, shape index: {}]
  %s1 = inlined_call_operand.hbm [shape: bf16[32,384], index: 1, kind: input, shape index: {}]
  %s2 = inlined_call_operand.hbm [shape: bf16[2,8,128], index: 2, kind: output, shape index: {0}]
  %s3 = inlined_call_operand.hbm [shape: bf16[2,8,128], index: 3, kind: output, shape index: {1}]
  %s4 = inlined_call_operand.hbm [shape: bf16[2,8,128], index: 4, kind: output, shape index: {2}]
  %5 = xla_tuple %s2, %s3, %s4
  %s6 = sld [smem:[#allocation0]]
  $region65: #{tpu_custom_call.1} parent=0
    _
  %s8 = ssub.s32 1, %s6
  %s9 = scalar_select 0, %s8, %s6
  $region1: #{tpu_custom_call.1} parent=0
    #allocation2 [shape = 'u8[4096]{0}', space=vmem, size = 0x1000, scoped, tag = 'input window, operand 0']
    #allocation3 [shape = 's32[2]{0}', space=sflag, size = 0x8, scoped, tag = 'scoped memory for tpu_custom_call.1']
    #allocation4 [shape = 's32[2]{0}', space=sflag, size = 0x8, scoped, tag = 'scoped memory for tpu_custom_call.1']
    #allocation5 [shape = 'u8[24576]{0}', space=vmem, size = 0x6000, scoped, tag = 'input window, operand 1, single buffered']
    #allocation6 [shape = 's32[1]{0}', space=sflag, size = 0x4, scoped, tag = 'scoped memory for tpu_custom_call.1']
    #allocation7 [shape = 'u8[4096]{0}', space=vmem, size = 0x1000, scoped, tag = 'output window, operand 0']
    #allocation8 [shape = 'u8[4096]{0}', space=vmem, size = 0x1000, scoped, tag = 'output window, operand 1']
    #allocation9 [shape = 's32[2]{0}', space=sflag, size = 0x8, scoped, tag = 'scoped memory for tpu_custom_call.1']
    #allocation10 [shape = 'u8[4096]{0}', space=vmem, size = 0x1000, scoped, tag = 'output window, operand 2']
    %10 = vsyncpa [#allocation3], 0
    %s11 = scalar_lea.sflag [#allocation3], 1
    %12 = vsyncpa %s11, 0
    %13 = vsyncpa [#allocation6], 0
    %14 = vsyncpa [#allocation4], 0
    %s15 = scalar_lea.sflag [#allocation4], 1
    %16 = vsyncpa %s15, 0
    %17 = vsyncpa [#allocation9], 0
    %s18 = scalar_lea.sflag [#allocation9], 1
    %19 = vsyncpa %s18, 0
    loop: start=0, step=1, limit=4
    $region2: #{tpu_custom_call.1} parent=1 // loop_pre_header
      _
    $region3: #{tpu_custom_call.1} parent=1 // loop_header
      %s21 = sphi 0, %s25
      %p22 = scmp.ge.s32.totalorder %s21, 4
      %s28 = sphi 0, %s40
      %s29 = sphi 0, %s36
      %s30 = sphi 0, %s28
      %s31 = sphi 0, %s29
      %s32 = sphi 0, %s30
      %s33 = sphi 0, %s31
      %s45 = sphi 0, %s47
      %s48 = sphi 0, %s45
      %s49 = sphi 0, %s48
      %s65 = sphi 0, %s49
      %s69 = sphi 0, %s69
      %s71 = sphi 0, %s69
      %s72 = sphi 0, %s71
      %s86 = sphi 0, %s72
      %s94 = sphi 0, %s96
      %s97 = sphi 0, %s94
      %s98 = sphi 0, %s97
      %s114 = sphi 0, %s98
      %s122 = sphi 0, %s124
      %s125 = sphi 0, %s122
      %s126 = sphi 0, %s125
      %s142 = sphi 0, %s126
      %s150 = sphi 0, %s152
      %s153 = sphi 0, %s150
      %s154 = sphi 0, %s153
      %s170 = sphi 0, %s154
    $region4: #{tpu_custom_call.1} parent=1 // loop_header_branch
      %24 = sbr.rel (%p22) target = $region8
    $region5: #{tpu_custom_call.1} parent=1 // loop_body
      %s26 = ssub.s32 %s21, 1
      %s27 = ssub.s32 %s21, 2
      %s34 = sadd.s32 1, %s29
      %p35 = scmp.ge.s32.totalorder %s34, 1
      %s36 = scalar_select %p35, 0, %s34
      %s37 = sadd.s32 1, %s28
      %s38 = scalar_select %p35, %s37, %s28
      %p39 = scmp.ge.s32.totalorder %s38, 2
      %s40 = scalar_select %p39, 0, %s38
      %s41 = ssub.s32 %s28, %s40
      %s42 = ssub.s32 %s29, %s36
      %s43 = sor.u32 %s41, %s42
      %p44 = scmp.eq.s32.totalorder %s43, 0
      %s46 = sadd.s32 %s45, 1
      %s47 = scalar_select %p44, %s45, %s46
      %p50 = pneg %p44
      %p51 = scmp.eq.s32.totalorder %s21, 1
      %p52 = por %p50, %p51
      %p53 = scmp.ne.s32.totalorder %s45, %s48
      %p54 = scmp.eq.s32.totalorder %s21, 0
      %p55 = por %p53, %p54
      %p56 = scmp.ne.s32.totalorder %s45, %s48
      %p57 = scmp.eq.s32.totalorder %s26, 1
      %p58 = por %p56, %p57
      %p59 = scmp.ne.s32.totalorder %s48, %s49
      %p60 = scmp.eq.s32.totalorder %s26, 0
      %p61 = por %p59, %p60
      %p62 = scmp.ne.s32.totalorder %s48, %s49
      %p63 = scmp.eq.s32.totalorder %s27, 1
      %p64 = por %p62, %p63
      %p66 = scmp.ne.s32.totalorder %s49, %s65
      %p67 = scmp.eq.s32.totalorder %s27, 0
      %p68 = por %p66, %p67
      %s70 = sadd.s32 %s69, 1
      %p73 = scmp.eq.s32.totalorder %s21, 1
      %p74 = scmp.ne.s32.totalorder %s69, %s71
      %p75 = scmp.eq.s32.totalorder %s21, 0
      %p76 = por %p74, %p75
      %p77 = scmp.ne.s32.totalorder %s69, %s71
      %p78 = scmp.eq.s32.totalorder %s26, 1
      %p79 = por %p77, %p78
      %p80 = scmp.ne.s32.totalorder %s71, %s72
      %p81 = scmp.eq.s32.totalorder %s26, 0
      %p82 = por %p80, %p81
      %p83 = scmp.ne.s32.totalorder %s71, %s72
      %p84 = scmp.eq.s32.totalorder %s27, 1
      %p85 = por %p83, %p84
      %p87 = scmp.ne.s32.totalorder %s72, %s86
      %p88 = scmp.eq.s32.totalorder %s27, 0
      %p89 = por %p87, %p88
      %s90 = ssub.s32 %s28, %s40
      %s91 = ssub.s32 %s29, %s36
      %s92 = sor.u32 %s90, %s91
      %p93 = scmp.eq.s32.totalorder %s92, 0
      %s95 = sadd.s32 %s94, 1
      %s96 = scalar_select %p93, %s94, %s95
      %p99 = pneg %p93
      %p100 = scmp.eq.s32.totalorder %s21, 1
      %p101 = por %p99, %p100
      %p102 = scmp.ne.s32.totalorder %s94, %s97
      %p103 = scmp.eq.s32.totalorder %s21, 0
      %p104 = por %p102, %p103
      %p105 = scmp.ne.s32.totalorder %s94, %s97
      %p106 = scmp.eq.s32.totalorder %s26, 1
      %p107 = por %p105, %p106
      %p108 = scmp.ne.s32.totalorder %s97, %s98
      %p109 = scmp.eq.s32.totalorder %s26, 0
      %p110 = por %p108, %p109
      %p111 = scmp.ne.s32.totalorder %s97, %s98
      %p112 = scmp.eq.s32.totalorder %s27, 1
      %p113 = por %p111, %p112
      %p115 = scmp.ne.s32.totalorder %s98, %s114
      %p116 = scmp.eq.s32.totalorder %s27, 0
      %p117 = por %p115, %p116
      %s118 = ssub.s32 %s28, %s40
      %s119 = ssub.s32 %s29, %s36
      %s120 = sor.u32 %s118, %s119
      %p121 = scmp.eq.s32.totalorder %s120, 0
      %s123 = sadd.s32 %s122, 1
      %s124 = scalar_select %p121, %s122, %s123
      %p127 = pneg %p121
      %p128 = scmp.eq.s32.totalorder %s21, 1
      %p129 = por %p127, %p128
      %p130 = scmp.ne.s32.totalorder %s122, %s125
      %p131 = scmp.eq.s32.totalorder %s21, 0
      %p132 = por %p130, %p131
      %p133 = scmp.ne.s32.totalorder %s122, %s125
      %p134 = scmp.eq.s32.totalorder %s26, 1
      %p135 = por %p133, %p134
      %p136 = scmp.ne.s32.totalorder %s125, %s126
      %p137 = scmp.eq.s32.totalorder %s26, 0
      %p138 = por %p136, %p137
      %p139 = scmp.ne.s32.totalorder %s125, %s126
      %p140 = scmp.eq.s32.totalorder %s27, 1
      %p141 = por %p139, %p140
      %p143 = scmp.ne.s32.totalorder %s126, %s142
      %p144 = scmp.eq.s32.totalorder %s27, 0
      %p145 = por %p143, %p144
      %s146 = ssub.s32 %s28, %s40
      %s147 = ssub.s32 %s29, %s36
      %s148 = sor.u32 %s146, %s147
      %p149 = scmp.eq.s32.totalorder %s148, 0
      %s151 = sadd.s32 %s150, 1
      %s152 = scalar_select %p149, %s150, %s151
      %p155 = pneg %p149
      %p156 = scmp.eq.s32.totalorder %s21, 1
      %p157 = por %p155, %p156
      %p158 = scmp.ne.s32.totalorder %s150, %s153
      %p159 = scmp.eq.s32.totalorder %s21, 0
      %p160 = por %p158, %p159
      %p161 = scmp.ne.s32.totalorder %s150, %s153
      %p162 = scmp.eq.s32.totalorder %s26, 1
      %p163 = por %p161, %p162
      %p164 = scmp.ne.s32.totalorder %s153, %s154
      %p165 = scmp.eq.s32.totalorder %s26, 0
      %p166 = por %p164, %p165
      %p167 = scmp.ne.s32.totalorder %s153, %s154
      %p168 = scmp.eq.s32.totalorder %s27, 1
      %p169 = por %p167, %p168
      %p171 = scmp.ne.s32.totalorder %s154, %s170
      %p172 = scmp.eq.s32.totalorder %s27, 0
      %p173 = por %p171, %p172
      %p174 = scmp.le.s32.totalorder 1, %s21
      %p175 = scmp.lt.s32.totalorder %s21, 3
      %p176 = pnand %p174, %p175
      %p177 = pneg %p176
      // Predicated region
      $region9: #{tpu_custom_call.1} parent=5 // pred_check
        _
      $region10: #{tpu_custom_call.1} parent=5 // pred_check_branch
        %179 = sbr.rel (%p176) target = $region12
      $region11: #{tpu_custom_call.1} parent=5 // pred_region
        %s180 = ssub.s32 %s21, 1
        // Predicated region
        $region13: #{tpu_custom_call.1} parent=11 // pred_check
          %p181 = pneg %p82
        $region14: #{tpu_custom_call.1} parent=11 // pred_check_branch
          %183 = sbr.rel (%p181) target = $region16
        $region15: #{tpu_custom_call.1} parent=11 // pred_region
          %s185 = ssub.s32 768, 768
          %186 = vsyncadd [#allocation6], %s185
          %s187 = sshll.u32 [#allocation5], 4
          %s188 = int_to_ptr.vmem [resolvable:$true] %s187
          %193 = dma.hbm_to_vmem [thread:$0]  %s1, 768, %s188, [#allocation6], 192, 192, 12
        $region16: #{tpu_custom_call.1} parent=11 // pred_fallthru
          _
      $region12: #{tpu_custom_call.1} parent=5 // pred_fallthru
        _
      %p194 = scmp.lt.s32.totalorder %s21, 2
      // Predicated region
      $region17: #{tpu_custom_call.1} parent=5 // pred_check
        %p195 = pneg %p194
      $region18: #{tpu_custom_call.1} parent=5 // pred_check_branch
        %197 = sbr.rel (%p195) target = $region20
      $region19: #{tpu_custom_call.1} parent=5 // pred_region
        // Predicated region
        $region21: #{tpu_custom_call.1} parent=19 // pred_check
          %p198 = pneg %p55
        $region22: #{tpu_custom_call.1} parent=19 // pred_check_branch
          %200 = sbr.rel (%p198) target = $region24
        $region23: #{tpu_custom_call.1} parent=19 // pred_region
          %s201 = sand.u32 %s45, 1
          %s202 = scalar_lea.sflag [#allocation3], %s201
          %s203 = sand.u32 %s45, 1
          %s204 = smul.addr %s203, 4
          %s205 = scalar_lea.vmem [#allocation2], %s204
          %s207 = ssub.s32 64, 64
          %208 = vsyncadd %s202, %s207
          %s209 = sadd.s32 %s29, %s28
          %s210 = smul.addr %s209, 64
          %s211 = scalar_lea.hbm %s0, %s210
          %s213 = sshll.u32 %s205, 4
          %s214 = int_to_ptr.vmem [resolvable:$true] %s213
          %216 = dma.hbm_to_vmem [thread:$0]  %s211, 64, %s214, %s202
        $region24: #{tpu_custom_call.1} parent=19 // pred_fallthru
          _
      $region20: #{tpu_custom_call.1} parent=5 // pred_fallthru
        _
      %p217 = scmp.le.s32.totalorder 1, %s21
      %p218 = scmp.lt.s32.totalorder %s21, 3
      %p219 = pnand %p217, %p218
      %p220 = pneg %p219
      // Predicated region
      $region25: #{tpu_custom_call.1} parent=5 // pred_check
        _
      $region26: #{tpu_custom_call.1} parent=5 // pred_check_branch
        %222 = sbr.rel (%p219) target = $region28
      $region27: #{tpu_custom_call.1} parent=5 // pred_region
        %s223 = ssub.s32 %s21, 1
        %s224 = sand.u32 %s48, 1
        %s225 = scalar_lea.sflag [#allocation3], %s224
        %s226 = sand.u32 %s48, 1
        %s227 = smul.addr %s226, 4
        %s228 = scalar_lea.vmem [#allocation2], %s227
        // Predicated region
        $region29: #{tpu_custom_call.1} parent=27 // pred_check
          %p229 = pneg %p61
        $region30: #{tpu_custom_call.1} parent=27 // pred_check_branch
          %231 = sbr.rel (%p229) target = $region32
        $region31: #{tpu_custom_call.1} parent=27 // pred_region
          %232 = dma.done %s225, 64
        $region32: #{tpu_custom_call.1} parent=27 // pred_fallthru
          _
        // Predicated region
        $region33: #{tpu_custom_call.1} parent=27 // pred_check
          %p233 = pneg %p82
        $region34: #{tpu_custom_call.1} parent=27 // pred_check_branch
          %235 = sbr.rel (%p233) target = $region36
        $region35: #{tpu_custom_call.1} parent=27 // pred_region
          %236 = dma.done [#allocation6], 768
        $region36: #{tpu_custom_call.1} parent=27 // pred_fallthru
          _
        %s237 = sand.u32 %s48, 1
        %s238 = scalar_lea.sflag [#allocation3], %s237
        %s239 = sand.u32 %s48, 1
        %s240 = smul.addr %s239, 4
        %s241 = scalar_lea.vmem [#allocation2], %s240
        %p242 = pneg %p61
        %p243 = pneg %p58
        %p244 = pneg %p82
        %p245 = pneg %p79
        %p246 = pneg %p110
        %p247 = pneg %p107
        %s248 = sand.u32 %s97, 1
        %s249 = scalar_lea.sflag [#allocation4], %s248
        %s250 = sand.u32 %s97, 1
        %s251 = smul.addr %s250, 4
        %s252 = scalar_lea.vmem [#allocation7], %s251
        %p253 = pneg %p138
        %p254 = pneg %p135
        %s255 = sand.u32 %s26, 1
        %s256 = scalar_lea.sflag [#allocation9], %s255
        %s257 = sand.u32 %s125, 1
        %s258 = smul.addr %s257, 4
        %s259 = scalar_lea.vmem [#allocation8], %s258
        %p260 = pneg %p166
        %p261 = pneg %p163
        %s262 = sand.u32 %s26, 1
        %s263 = scalar_lea.sflag [#allocation9], %s262
        %s264 = sand.u32 %s153, 1
        %s265 = smul.addr %s264, 4
        %s266 = scalar_lea.vmem [#allocation10], %s265
        %v268 = vld [vmem:[%s228] sm:$0xf]
        %v269 = vld [vmem:[#allocation5] sm:$0xff]
        %v270 = vld [vmem:[#allocation5 + $0x8] sm:$0xf]
        %v271 = vld [vmem:[#allocation5 + $0xc] sm:$0xff]
        %v272 = vld [vmem:[#allocation5 + $0x14] sm:$0xf]
        %v273 = vld [vmem:[#allocation5 + $0x18] sm:$0xff]
        %v274 = vld [vmem:[#allocation5 + $0x20] sm:$0xf]
        %v275 = vld [vmem:[#allocation5 + $0x24] sm:$0xff]
        %v276 = vld [vmem:[#allocation5 + $0x2c] sm:$0xf]
        %v285 = vunpack.c.l.b16 %v269
        %v286 = vunpack.c.h.b16 %v269
        %v287 = vunpack.c.l.b16 %v270
        %v288 = vunpack.c.l.b16 %v271
        %v289 = vunpack.c.h.b16 %v271
        %v290 = vunpack.c.l.b16 %v272
        %v291 = vunpack.c.l.b16 %v273
        %v292 = vunpack.c.h.b16 %v273
        %v293 = vunpack.c.l.b16 %v274
        %v294 = vunpack.c.l.b16 %v275
        %v295 = vunpack.c.h.b16 %v275
        %v296 = vunpack.c.l.b16 %v276
        %v297 = vpack.c.b16 %v288, %v285
        %v298 = vpack.c.b16 %v289, %v286
        %v299 = vpack.c.b16 %v290, %v287
        %v300 = vpack.c.b16 %v294, %v291
        %v301 = vpack.c.b16 %v295, %v292
        %v302 = vpack.c.b16 %v296, %v293
        %vm309 = vcmask 261120
        %v311 = vsel %vm309, %v268, 0
        %313 = vmatprep.subr.bf16.mxu0 %v298
        %314 = vmatpush1.bf16.msra.mxu0 %v297
        %315 = vmatprep.subr.bf16.mxu0 %v301
        %316 = vmatpush1.bf16.msra.mxu0 %v300
        %317 = vmatprep.subr.bf16.mxu0 0
        %318 = vmatpush1.bf16.msra.mxu0 0
        %319 = vmatprep.subr.bf16.mxu0 0
        %320 = vmatpush1.bf16.msra.mxu0 0
        %321 = vmatprep.subr.bf16.mxu0 0
        %322 = vmatpush1.bf16.msra.mxu0 0
        %323 = vmatprep.subr.bf16.mxu0 0
        %324 = vmatpush1.bf16.msra.mxu0 0
        %325 = vmatprep.subr.bf16.mxu0 0
        %326 = vmatpush1.bf16.msra.mxu0 0
        %327 = vmatprep.subr.bf16.mxu0 0
        %328 = vmatpush1.bf16.msra.mxu0 0
        %329 = vmatprep.subr.bf16.mxu0 0
        %330 = vmatpush1.bf16.msra.mxu0 0
        %331 = vmatprep.subr.bf16.mxu0 0
        %332 = vmatpush1.bf16.msra.mxu0 0
        %333 = vmatprep.subr.bf16.mxu0 0
        %334 = vmatpush1.bf16.msra.mxu0 0
        %335 = vmatprep.subr.bf16.mxu0 0
        %336 = vmatpush1.bf16.msra.mxu0 0
        %337 = vmatprep.subr.bf16.mxu0 0
        %338 = vmatpush1.bf16.msra.mxu0 0
        %339 = vmatprep.subr.bf16.mxu0 0
        %340 = vmatpush1.bf16.msra.mxu0 0
        %341 = vmatprep.subr.bf16.mxu0 0
        %342 = vmatpush1.bf16.msra.mxu0 0
        %343 = vmatprep.subr.bf16.mxu0 0
        %344 = vmatpush1.bf16.msra.mxu0 0
        %345 = vmatprep.mubr.bf16.mxu0 0
        %346 = vmatmul.mubr.bf16.gmra.mrb[0].mxu0 %v311
        %v347 = vpop.f32.mrb[0].mxu0
        %v348 = vadd.f32 0.0, %v347
        %v349 = vpop.f32.mrb[0].mxu0
        %v350 = vadd.f32 0.0, %v349
        %v351 = vpop.f32.mrb[0].mxu0
        %v352 = vpop.f32.mrb[0].mxu0
        %353 = vdwg.mxu0
        %354 = vmatprep.subr.bf16.mxu0 0
        %355 = vmatpush1.bf16.msra.mxu0 %v299
        %356 = vmatprep.subr.bf16.mxu0 0
        %357 = vmatpush1.bf16.msra.mxu0 %v302
        %358 = vmatprep.subr.bf16.mxu0 0
        %359 = vmatpush1.bf16.msra.mxu0 0
        %360 = vmatprep.subr.bf16.mxu0 0
        %361 = vmatpush1.bf16.msra.mxu0 0
        %362 = vmatprep.subr.bf16.mxu0 0
        %363 = vmatpush1.bf16.msra.mxu0 0
        %364 = vmatprep.subr.bf16.mxu0 0
        %365 = vmatpush1.bf16.msra.mxu0 0
        %366 = vmatprep.subr.bf16.mxu0 0
        %367 = vmatpush1.bf16.msra.mxu0 0
        %368 = vmatprep.subr.bf16.mxu0 0
        %369 = vmatpush1.bf16.msra.mxu0 0
        %370 = vmatprep.subr.bf16.mxu0 0
        %371 = vmatpush1.bf16.msra.mxu0 0
        %372 = vmatprep.subr.bf16.mxu0 0
        %373 = vmatpush1.bf16.msra.mxu0 0
        %374 = vmatprep.subr.bf16.mxu0 0
        %375 = vmatpush1.bf16.msra.mxu0 0
        %376 = vmatprep.subr.bf16.mxu0 0
        %377 = vmatpush1.bf16.msra.mxu0 0
        %378 = vmatprep.subr.bf16.mxu0 0
        %379 = vmatpush1.bf16.msra.mxu0 0
        %380 = vmatprep.subr.bf16.mxu0 0
        %381 = vmatpush1.bf16.msra.mxu0 0
        %382 = vmatprep.subr.bf16.mxu0 0
        %383 = vmatpush1.bf16.msra.mxu0 0
        %384 = vmatprep.subr.bf16.mxu0 0
        %385 = vmatpush1.bf16.msra.mxu0 0
        %386 = vmatprep.mubr.bf16.mxu0 0
        %387 = vmatmul.mubr.bf16.gmra.mrb[0].mxu0 %v311
        %v388 = vpop.f32.mrb[0].mxu0
        %v389 = vadd.f32 0.0, %v388
        %v390 = vpop.f32.mrb[0].mxu0
        %v391 = vpop.f32.mrb[0].mxu0
        %v392 = vpop.f32.mrb[0].mxu0
        %393 = vdwg.mxu0
        %v394 = vpack.c.bf16 %v348, %v348
        %395 = vst [vmem:[%s252] sm:$0xf] %v394
        %v396 = vpack.c.bf16 %v350, %v350
        %397 = vst [vmem:[%s259] sm:$0xf] %v396
        %v398 = vpack.c.bf16 %v389, %v389
        %399 = vst [vmem:[%s266] sm:$0xf] %v398
        %s400 = sand.u32 %s97, 1
        %s401 = scalar_lea.sflag [#allocation4], %s400
        %s402 = sand.u32 %s97, 1
        %s403 = smul.addr %s402, 4
        %s404 = scalar_lea.vmem [#allocation7], %s403
        %s405 = sand.u32 %s26, 1
        %s406 = scalar_lea.sflag [#allocation9], %s405
        %s407 = sand.u32 %s125, 1
        %s408 = smul.addr %s407, 4
        %s409 = scalar_lea.vmem [#allocation8], %s408
        %s410 = sand.u32 %s26, 1
        %s411 = scalar_lea.sflag [#allocation9], %s410
        %s412 = sand.u32 %s153, 1
        %s413 = smul.addr %s412, 4
        %s414 = scalar_lea.vmem [#allocation10], %s413
        // Predicated region
        $region37: #{tpu_custom_call.1} parent=27 // pred_check
          %p415 = pneg %p107
        $region38: #{tpu_custom_call.1} parent=27 // pred_check_branch
          %417 = sbr.rel (%p415) target = $region40
        $region39: #{tpu_custom_call.1} parent=27 // pred_region
          %s419 = ssub.s32 64, 64
          %420 = vsyncadd %s401, %s419
          %s421 = sadd.s32 %s31, %s30
          %s422 = smul.addr %s421, 64
          %s423 = scalar_lea.hbm %s2, %s422
          %s425 = sshll.u32 %s404, 4
          %s426 = int_to_ptr.vmem [resolvable:$true] %s425
          %428 = dma.vmem_to_hbm [thread:$0]  %s426, 64, %s423, %s401
        $region40: #{tpu_custom_call.1} parent=27 // pred_fallthru
          _
        // Predicated region
        $region41: #{tpu_custom_call.1} parent=27 // pred_check
          %p429 = pneg %p135
        $region42: #{tpu_custom_call.1} parent=27 // pred_check_branch
          %431 = sbr.rel (%p429) target = $region44
        $region43: #{tpu_custom_call.1} parent=27 // pred_region
          %s433 = ssub.s32 64, 64
          %434 = vsyncadd %s406, %s433
          %s435 = sadd.s32 %s31, %s30
          %s436 = smul.addr %s435, 64
          %s437 = scalar_lea.hbm %s3, %s436
          %s439 = sshll.u32 %s409, 4
          %s440 = int_to_ptr.vmem [resolvable:$true] %s439
          %442 = dma.vmem_to_hbm [thread:$0]  %s440, 64, %s437, %s406
        $region44: #{tpu_custom_call.1} parent=27 // pred_fallthru
          _
        // Predicated region
        $region45: #{tpu_custom_call.1} parent=27 // pred_check
          %p443 = pneg %p163
        $region46: #{tpu_custom_call.1} parent=27 // pred_check_branch
          %445 = sbr.rel (%p443) target = $region48
        $region47: #{tpu_custom_call.1} parent=27 // pred_region
          %s447 = ssub.s32 64, 64
          %448 = vsyncadd %s411, %s447
          %s449 = sadd.s32 %s31, %s30
          %s450 = smul.addr %s449, 64
          %s451 = scalar_lea.hbm %s4, %s450
          %s453 = sshll.u32 %s414, 4
          %s454 = int_to_ptr.vmem [resolvable:$true] %s453
          %456 = dma.vmem_to_hbm [thread:$0]  %s454, 64, %s451, %s411
        $region48: #{tpu_custom_call.1} parent=27 // pred_fallthru
          _
      $region28: #{tpu_custom_call.1} parent=5 // pred_fallthru
        _
      %p457 = scmp.le.s32.totalorder 2, %s21
      // Predicated region
      $region49: #{tpu_custom_call.1} parent=5 // pred_check
        %p458 = pneg %p457
      $region50: #{tpu_custom_call.1} parent=5 // pred_check_branch
        %460 = sbr.rel (%p458) target = $region52
      $region51: #{tpu_custom_call.1} parent=5 // pred_region
        %s461 = ssub.s32 %s21, 2
        // Predicated region
        $region53: #{tpu_custom_call.1} parent=51 // pred_check
          %p462 = pneg %p113
        $region54: #{tpu_custom_call.1} parent=51 // pred_check_branch
          %464 = sbr.rel (%p462) target = $region56
        $region55: #{tpu_custom_call.1} parent=51 // pred_region
          %s465 = sand.u32 %s98, 1
          %s466 = scalar_lea.sflag [#allocation4], %s465
          %s467 = sand.u32 %s98, 1
          %s468 = smul.addr %s467, 4
          %s469 = scalar_lea.vmem [#allocation7], %s468
          %470 = dma.done %s466, 64
        $region56: #{tpu_custom_call.1} parent=51 // pred_fallthru
          _
        // Predicated region
        $region57: #{tpu_custom_call.1} parent=51 // pred_check
          %p471 = pneg %p141
        $region58: #{tpu_custom_call.1} parent=51 // pred_check_branch
          %473 = sbr.rel (%p471) target = $region60
        $region59: #{tpu_custom_call.1} parent=51 // pred_region
          %s474 = sand.u32 %s27, 1
          %s475 = scalar_lea.sflag [#allocation9], %s474
          %s476 = sand.u32 %s126, 1
          %s477 = smul.addr %s476, 4
          %s478 = scalar_lea.vmem [#allocation8], %s477
          %479 = dma.done %s475, 64
        $region60: #{tpu_custom_call.1} parent=51 // pred_fallthru
          _
        // Predicated region
        $region61: #{tpu_custom_call.1} parent=51 // pred_check
          %p480 = pneg %p169
        $region62: #{tpu_custom_call.1} parent=51 // pred_check_branch
          %482 = sbr.rel (%p480) target = $region64
        $region63: #{tpu_custom_call.1} parent=51 // pred_region
          %s483 = sand.u32 %s27, 1
          %s484 = scalar_lea.sflag [#allocation9], %s483
          %s485 = sand.u32 %s154, 1
          %s486 = smul.addr %s485, 4
          %s487 = scalar_lea.vmem [#allocation10], %s486
          %488 = dma.done %s484, 64
        $region64: #{tpu_custom_call.1} parent=51 // pred_fallthru
          _
      $region52: #{tpu_custom_call.1} parent=5 // pred_fallthru
        _
    $region6: #{tpu_custom_call.1} parent=1 // loop_footer
      %s25 = sadd.s32 1, %s21
    $region7: #{tpu_custom_call.1} parent=1 // loop_footer_branch
      %20 = sbr.rel target = $region3
    $region8: #{tpu_custom_call.1} parent=1 // loop_exit
      _
    %489 = vsyncpa [#allocation3], 1
    %s490 = scalar_lea.sflag [#allocation3], 1
    %491 = vsyncpa %s490, 1
    %492 = vsyncpa [#allocation6], 1
    %493 = vsyncpa [#allocation4], 1
    %s494 = scalar_lea.sflag [#allocation4], 1
    %495 = vsyncpa %s494, 1
    %496 = vsyncpa [#allocation9], 1
    %s497 = scalar_lea.sflag [#allocation9], 1
    %498 = vsyncpa %s497, 1

</llo_original>
